<compile_context>
chip_gen: v7x
topology: tpu7x:2x2x1
jax: 0.10.0
libtpu: 0.0.40
codegen_flags: <defaults>
</compile_context>

<pallas_src>
import jax
import jax.numpy as jnp
from jax.experimental import pallas as pl
from jax.experimental.pallas import tpu as pltpu


def _linear_kernel(w_ref, b_ref, x_ref, o_ref):
    # w_ref, b_ref: (1,) scalars in SMEM; x_ref / o_ref: (bm, bn) VMEM tiles.
    o_ref[...] = w_ref[0] * x_ref[...] + b_ref[0]


def _choose_blocks(M, N, dtype, target_tile_bytes):
    """Pick a lane-dense, multi-MiB tile sized for the dtype and shape."""
    itemsize = jnp.dtype(dtype).itemsize
    # Sub-32-bit dtypes pack along sublanes: f32 -> 8, bf16 -> 16, int8 -> 32.
    min_sublane = max(8, 32 // max(1, itemsize))

    # Lane (last) dim: a multiple of 128, or the full N (full-dim exemption for
    # small or non-multiple-of-128 N) so stores stay unmasked and DMAs large.
    if N <= 1024 or (N % 128) != 0:
        block_n = N
    else:
        block_n = 1024

    # Sublane dim: fold rows until the tile reaches ~target_tile_bytes.
    rows = max(min_sublane, target_tile_bytes // max(1, block_n * itemsize))
    if rows >= M:
        block_m = M                                   # full-dim exemption
    else:
        block_m = max(min_sublane, (rows // min_sublane) * min_sublane)
    return block_m, block_n


def linear_model(x, w, b, *, target_tile_bytes=2 * 1024 * 1024, in_place=False):
    """out = w * x + b (element-wise); w, b are shape-(1,) scalar parameters."""
    orig_shape = x.shape
    x2 = x if x.ndim == 2 else x.reshape(-1, orig_shape[-1])
    M, N = x2.shape

    block_m, block_n = _choose_blocks(M, N, x2.dtype, target_tile_bytes)
    grid = (pl.cdiv(M, block_m), pl.cdiv(N, block_n))   # ragged last blocks OK

    out = pl.pallas_call(
        _linear_kernel,
        out_shape=jax.ShapeDtypeStruct((M, N), x2.dtype),
        grid=grid,
        in_specs=[
            pl.BlockSpec(memory_space=pltpu.SMEM),                  # w (1,)
            pl.BlockSpec(memory_space=pltpu.SMEM),                  # b (1,)
            pl.BlockSpec((block_m, block_n), lambda i, j: (i, j)),  # x tile
        ],
        out_specs=pl.BlockSpec((block_m, block_n), lambda i, j: (i, j)),
        compiler_params=pltpu.CompilerParams(
            dimension_semantics=("parallel", "parallel"),
            vmem_limit_bytes=48 * 1024 * 1024,
        ),
        input_output_aliases={2: 0} if in_place else {},
    )(w.astype(x2.dtype), b.astype(x2.dtype), x2)

    return out.reshape(orig_shape)


if __name__ == "__main__":
    # Deterministic parameters matching LinearModel.__init__: w=[0.7], b=[0.6]
    w = jnp.array([0.7], dtype=jnp.float32)
    b = jnp.array([0.6], dtype=jnp.float32)

    key = jax.random.PRNGKey(0)

    # Test 1: small, aligned shape (single large tile; grid = (1, 1)).
    x = jax.random.normal(key, (32, 256), dtype=jnp.float32)
    out = jax.block_until_ready(linear_model(x, w, b))
    ref = w[0] * x + b[0]
    assert out.shape == x.shape and out.dtype == x.dtype
    assert jnp.allclose(out, ref, atol=1e-6, rtol=1e-6)

    # Test 2: ragged M + odd N, tiny tile target to force a multi-step grid
    # with a masked last block (exercises the pl.cdiv path).
    x2 = jax.random.normal(jax.random.PRNGKey(1), (36, 200), dtype=jnp.float32)
    out2 = jax.block_until_ready(
        linear_model(x2, w, b, target_tile_bytes=8 * 200 * 4)
    )
    ref2 = w[0] * x2 + b[0]
    assert out2.shape == x2.shape
    assert jnp.allclose(out2, ref2, atol=1e-6, rtol=1e-6)

    print("KERNEL_OK")
</pallas_src>

<mosaic_0001>
module attributes {stable_mosaic.version = 11 : i64} {
  func.func @_linear_kernel(%arg0: i32, %arg1: i32, %arg2: memref<1xf32, #tpu.memory_space<smem>>, %arg3: memref<1xf32, #tpu.memory_space<smem>>, %arg4: memref<32x256xf32, #tpu.memory_space<vmem>>, %arg5: memref<32x256xf32, #tpu.memory_space<vmem>>) attributes {dimension_semantics = [#tpu.dimension_semantics<parallel>, #tpu.dimension_semantics<parallel>], iteration_bounds = array<i64: 1, 1>, scalar_prefetch = 0 : i64, scratch_operands = 0 : i64, tpu.core_type = #tpu.core_type<tc>, window_params = [{transform_indices = @transform_0, window_bounds = array<i64: 1>}, {transform_indices = @transform_1, window_bounds = array<i64: 1>}, {transform_indices = @transform_2, window_bounds = array<i64: 32, 256>}, {transform_indices = @transform_3, window_bounds = array<i64: 32, 256>}]} {
    %c0 = arith.constant 0 : index
    %0 = memref.load %arg2[%c0] : memref<1xf32, #tpu.memory_space<smem>>
    %c0_0 = arith.constant 0 : index
    %c0_1 = arith.constant 0 : index
    %1 = vector.load %arg4[%c0_0, %c0_1] : memref<32x256xf32, #tpu.memory_space<vmem>>, vector<32x256xf32>
    %2 = vector.broadcast %0 : f32 to vector<32x256xf32>
    %3 = arith.mulf %2, %1 : vector<32x256xf32>
    %c0_2 = arith.constant 0 : index
    %4 = memref.load %arg3[%c0_2] : memref<1xf32, #tpu.memory_space<smem>>
    %5 = vector.broadcast %4 : f32 to vector<32x256xf32>
    %6 = arith.addf %3, %5 : vector<32x256xf32>
    %c0_3 = arith.constant 0 : index
    %c0_4 = arith.constant 0 : index
    %7 = vector.load %arg5[%c0_3, %c0_4] : memref<32x256xf32, #tpu.memory_space<vmem>>, vector<32x256xf32>
    tpu.vector_store %arg5[%c0_3, %c0_4], %6 {strides = array<i32>} : memref<32x256xf32, #tpu.memory_space<vmem>>, vector<32x256xf32>,
    return
  }
  func.func @transform_0(%arg0: i32, %arg1: i32) -> i32 {
    %c0_i32 = arith.constant 0 : i32
    %c0_i32_0 = arith.constant 0 : i32
    return %c0_i32 : i32
  }
  func.func @transform_1(%arg0: i32, %arg1: i32) -> i32 {
    %c0_i32 = arith.constant 0 : i32
    %c0_i32_0 = arith.constant 0 : i32
    return %c0_i32 : i32
  }
  func.func @transform_2(%arg0: i32, %arg1: i32) -> (i32, i32) {
    %c0_i32 = arith.constant 0 : i32
    return %arg0, %arg1 : i32, i32
  }
  func.func @transform_3(%arg0: i32, %arg1: i32) -> (i32, i32) {
    %c0_i32 = arith.constant 0 : i32
    return %arg0, %arg1 : i32, i32
  }
}

</mosaic_0001>

<llo_original>
// kernel: tpu_custom_call.1
$region0: #{tpu_custom_call.1}
  #allocation0 [shape = 'u32[]', space=smem, size = 0x4, offset = 0x4, fixed_abs, tag = 'smem constant byte address 0x4 - core index']
  #allocation1 [shape = 'u32[144,128]{1,0:T(1,128)}', space=vmem, size = 0x12000, scoped, tag = 'internal scratch']
  #allocation2 [shape = 'f32[1]{0:T(128)S(6)}', space=smem, size = 0x200, scoped, tag = 'scoped memory for tpu_custom_call.1']
  #allocation3 [shape = 'f32[1]{0:T(128)S(6)}', space=smem, size = 0x200, scoped, tag = 'scoped memory for tpu_custom_call.1']
  %s0 = inlined_call_operand.<no memory space> [shape: f32[1], index: 0, kind: input, shape index: {}]
  %s1 = inlined_call_operand.<no memory space> [shape: f32[1], index: 1, kind: input, shape index: {}]
  %s2 = inlined_call_operand.hbm [shape: f32[32,256], index: 2, kind: input, shape index: {}]
  %s3 = inlined_call_operand.hbm [shape: f32[32,256], index: 3, kind: output, shape index: {}]
  %s4 = sld [smem:[#allocation0]]
  $region26: #{tpu_custom_call.1} parent=0
    _
  %s6 = ssub.s32 1, %s4
  %s7 = scalar_select 0, %s6, %s4
  %8 = sst [smem:[#allocation2]] %s0
  %9 = sst [smem:[#allocation3]] %s1
  $region1: #{tpu_custom_call.1} parent=0
    #allocation4 [shape = 'u8[32768]{0}', space=vmem, size = 0x8000, scoped, tag = 'input window, operand 2, single buffered']
    #allocation5 [shape = 's32[1]{0}', space=sflag, size = 0x4, scoped, tag = 'scoped memory for tpu_custom_call.1']
    #allocation6 [shape = 's32[1]{0}', space=sflag, size = 0x4, scoped, tag = 'scoped memory for tpu_custom_call.1']
    #allocation7 [shape = 'u8[32768]{0}', space=vmem, size = 0x8000, scoped, tag = 'output window, operand 0, single buffered']
    %10 = vsyncpa [#allocation5], 0
    %11 = vsyncpa [#allocation6], 0
    // Predicated region
    $region2: #{tpu_custom_call.1} parent=1 // pred_check
      _
    $region3: #{tpu_custom_call.1} parent=1 // pred_check_branch
      %13 = sbr.rel (0) target = $region5
    $region4: #{tpu_custom_call.1} parent=1 // pred_region
      _
    $region5: #{tpu_custom_call.1} parent=1 // pred_fallthru
      _
    // Predicated region
    $region6: #{tpu_custom_call.1} parent=1 // pred_check
      _
    $region7: #{tpu_custom_call.1} parent=1 // pred_check_branch
      %15 = sbr.rel (0) target = $region9
    $region8: #{tpu_custom_call.1} parent=1 // pred_region
      _
    $region9: #{tpu_custom_call.1} parent=1 // pred_fallthru
      _
    // Predicated region
    $region10: #{tpu_custom_call.1} parent=1 // pred_check
      _
    $region11: #{tpu_custom_call.1} parent=1 // pred_check_branch
      %17 = sbr.rel (0) target = $region13
    $region12: #{tpu_custom_call.1} parent=1 // pred_region
      %s19 = ssub.s32 1024, 1024
      %20 = vsyncadd [#allocation5], %s19
      %s21 = sshll.u32 [#allocation4], 4
      %s22 = int_to_ptr.vmem [resolvable:$true] %s21
      %27 = dma.hbm_to_vmem [thread:$0]  %s2, 1024, %s22, [#allocation5], 256, 256, 16
    $region13: #{tpu_custom_call.1} parent=1 // pred_fallthru
      _
    // Predicated region
    $region14: #{tpu_custom_call.1} parent=1 // pred_check
      _
    $region15: #{tpu_custom_call.1} parent=1 // pred_check_branch
      %29 = sbr.rel (0) target = $region17
    $region16: #{tpu_custom_call.1} parent=1 // pred_region
      %30 = dma.done [#allocation5], 1024
    $region17: #{tpu_custom_call.1} parent=1 // pred_fallthru
      _
    %s31 = sld [smem:[#allocation2]]
    %v32 = vld [vmem:[#allocation4] sm:$0xff]
    %v33 = vld [vmem:[#allocation4 + $0x8] sm:$0xff]
    %v34 = vld [vmem:[#allocation4 + $0x10] sm:$0xff]
    %v35 = vld [vmem:[#allocation4 + $0x18] sm:$0xff]
    %v36 = vld [vmem:[#allocation4 + $0x20] sm:$0xff]
    %v37 = vld [vmem:[#allocation4 + $0x28] sm:$0xff]
    %v38 = vld [vmem:[#allocation4 + $0x30] sm:$0xff]
    %v39 = vld [vmem:[#allocation4 + $0x38] sm:$0xff]
    %v40 = vstv %s31
    %v41 = vmul.f32 %v40, %v32
    %v42 = vmul.f32 %v40, %v33
    %v43 = vmul.f32 %v40, %v34
    %v44 = vmul.f32 %v40, %v35
    %v45 = vmul.f32 %v40, %v36
    %v46 = vmul.f32 %v40, %v37
    %v47 = vmul.f32 %v40, %v38
    %v48 = vmul.f32 %v40, %v39
    %s49 = sld [smem:[#allocation3]]
    %v50 = vstv %s49
    %v51 = vadd.f32 %v41, %v50
    %v52 = vadd.f32 %v42, %v50
    %v53 = vadd.f32 %v43, %v50
    %v54 = vadd.f32 %v44, %v50
    %v55 = vadd.f32 %v45, %v50
    %v56 = vadd.f32 %v46, %v50
    %v57 = vadd.f32 %v47, %v50
    %v58 = vadd.f32 %v48, %v50
    %59 = vst [vmem:[#allocation7] sm:$0xff] %v51
    %60 = vst [vmem:[#allocation7 + $0x8] sm:$0xff] %v52
    %61 = vst [vmem:[#allocation7 + $0x10] sm:$0xff] %v53
    %62 = vst [vmem:[#allocation7 + $0x18] sm:$0xff] %v54
    %63 = vst [vmem:[#allocation7 + $0x20] sm:$0xff] %v55
    %64 = vst [vmem:[#allocation7 + $0x28] sm:$0xff] %v56
    %65 = vst [vmem:[#allocation7 + $0x30] sm:$0xff] %v57
    %66 = vst [vmem:[#allocation7 + $0x38] sm:$0xff] %v58
    // Predicated region
    $region18: #{tpu_custom_call.1} parent=1 // pred_check
      _
    $region19: #{tpu_custom_call.1} parent=1 // pred_check_branch
      %68 = sbr.rel (0) target = $region21
    $region20: #{tpu_custom_call.1} parent=1 // pred_region
      %s70 = ssub.s32 1024, 1024
      %71 = vsyncadd [#allocation6], %s70
      %s72 = sshll.u32 [#allocation7], 4
      %s73 = int_to_ptr.vmem [resolvable:$true] %s72
      %78 = dma.vmem_to_hbm [thread:$0]  %s73, 1024, %s3, [#allocation6], 256, 256, 16
    $region21: #{tpu_custom_call.1} parent=1 // pred_fallthru
      _
    // Predicated region
    $region22: #{tpu_custom_call.1} parent=1 // pred_check
      _
    $region23: #{tpu_custom_call.1} parent=1 // pred_check_branch
      %80 = sbr.rel (0) target = $region25
    $region24: #{tpu_custom_call.1} parent=1 // pred_region
      %81 = dma.done [#allocation6], 1024
    $region25: #{tpu_custom_call.1} parent=1 // pred_fallthru
      _
    %82 = vsyncpa [#allocation5], 1
    %83 = vsyncpa [#allocation6], 1

</llo_original>
